<compile_context>
chip_gen: v7x
topology: tpu7x:2x2x1
jax: 0.10.0
libtpu: 0.0.40
codegen_flags: <defaults>
</compile_context>

<pallas_src>
import functools

import jax
import jax.numpy as jnp
import numpy as np
from jax.experimental import pallas as pl
from jax.experimental.pallas import tpu as pltpu


def _tile_and_pad(n: int):
    """Pick a lane-tile size (<= 8192) and the padded pixel count (tile multiple)."""
    for t in (8192, 4096, 2048, 1024, 512, 256, 128):
        if n % t == 0:
            return t, n
    n_pad = -(-n // 512) * 512                      # round up to a multiple of 512
    for t in (8192, 4096, 2048, 1024, 512):
        if n_pad % t == 0:
            return t, n_pad
    return 512, n_pad                               # unreachable


def _mi_kernel(yt_ref, yp_ref, out_ref, pab_acc, *,
               preterm, max_clip, channels, n_valid, n_padded,
               num_bins, minval, bin_step, tile_n):
    n = pl.program_id(1)

    @pl.when(n == 0)
    def _():
        pab_acc[...] = jnp.zeros_like(pab_acc)

    # Bin centers as a compile-time sublane iota: centers[i] = minval + i * step.
    bin_idx = jax.lax.broadcasted_iota(jnp.int32, (num_bins, 1), 0).astype(jnp.float32)
    centers = minval + bin_step * bin_idx                       # (K, 1)

    # Zero-weight mask for padded lanes (only materialized if padding exists).
    if n_padded != n_valid:
        lane = jax.lax.broadcasted_iota(jnp.int32, (1, tile_n), 1)
        gidx = lane + n * tile_n
        valid = (gidx < n_valid).astype(jnp.float32)            # (1, TN)
    else:
        valid = None

    def bin_probs(y_row, mask):                                 # y_row: (1, TN)
        y = jnp.clip(y_row.astype(jnp.float32) * 0.5 + 0.5, 0.0, max_clip)
        d = y - centers                                         # (K, TN) broadcast
        p = jnp.exp(-preterm * (d * d))                         # EUP exps (the bound slot)
        # One (1, TN) approx reciprocal + broadcast VPU multiply instead of a
        # (K, TN) divide; the padding mask folds into the (1, TN) row for free.
        inv = pl.reciprocal(jnp.sum(p, axis=0, keepdims=True), approx=True)
        if mask is not None:
            inv = inv * mask
        # bf16 operands for the MXU; accumulation stays f32.
        return (p * inv).astype(jnp.bfloat16)                   # (K, TN)

    # Masking only Ia suffices: it zeroes the padded pixels' contribution to pab
    # and (via the epilogue row/col sums) to both derived marginals.
    ia = bin_probs(yt_ref[0], valid)
    ib = bin_probs(yp_ref[0], None)

    # pab[i, j] += sum_n Ia[i, n] * Ib[j, n]   (contract the pixel/lane axis).
    pab_acc[...] += jax.lax.dot_general(
        ia, ib, (((1,), (1,)), ((), ())), preferred_element_type=jnp.float32)

    @pl.when(n == pl.num_programs(1) - 1)
    def _():
        acc = pab_acc[...]
        pab = acc / channels                                    # torch quirk: / shape[1]
        # Marginals from row/col sums of the raw joint histogram (bins sum to 1/pixel).
        pa = jnp.sum(acc, axis=1, keepdims=True) * (1.0 / n_valid)   # (K, 1)
        pb = jnp.sum(acc, axis=0, keepdims=True) * (1.0 / n_valid)   # (1, K)
        papb = pa * pb + 1e-6                                   # (K, K) outer product
        mi = jnp.sum(pab * jnp.log(pab / papb + 1e-6))
        out_ref[...] = jnp.broadcast_to(mi, out_ref.shape)


class MutualInformation2D:
    """Pallas-TPU port of the PyTorch MutualInformation2D loss (forward only)."""

    def __init__(self, sigma_ratio: float = 1.0, minval: float = 0.0,
                 maxval: float = 1.0, num_bin: int = 32):
        self.num_bins = int(num_bin)
        self.max_clip = float(maxval)
        self.minval = float(minval)
        self.bin_step = (float(maxval) - float(minval)) / (num_bin - 1)
        centers_np = np.linspace(minval, maxval, num_bin).astype(np.float32)
        self.vol_bin_centers = jnp.asarray(centers_np)
        sigma = float(np.mean(np.diff(centers_np))) * sigma_ratio
        self.preterm = 1.0 / (2.0 * sigma ** 2)

    def __call__(self, y_true: jax.Array, y_pred: jax.Array) -> jax.Array:
        assert y_true.shape == y_pred.shape
        B = y_true.shape[0]
        C = y_true.shape[1]                     # torch quirk: pab divided by shape[1]
        N = int(np.prod(y_true.shape[1:]))
        K = self.num_bins
        tn, n_pad = _tile_and_pad(N)

        yt = y_true.reshape(B, 1, N)            # keep caller's dtype (no wrapper upcast)
        yp = y_pred.reshape(B, 1, N)
        if n_pad != N:
            yt = jnp.pad(yt, ((0, 0), (0, 0), (0, n_pad - N)))
            yp = jnp.pad(yp, ((0, 0), (0, 0), (0, n_pad - N)))

        kernel = functools.partial(
            _mi_kernel,
            preterm=float(self.preterm),
            max_clip=self.max_clip,
            channels=float(C),
            n_valid=int(N),
            n_padded=int(n_pad),
            num_bins=K,
            minval=self.minval,
            bin_step=self.bin_step,
            tile_n=tn)

        # Note: on v7x with B == 1 the reduction axis could additionally be split
        # across the two TensorCores; not done here (B >= 1 generic path).
        out = pl.pallas_call(
            kernel,
            out_shape=jax.ShapeDtypeStruct((B, 8, 128), jnp.float32),
            grid_spec=pltpu.PrefetchScalarGridSpec(
                num_scalar_prefetch=0,
                grid=(B, n_pad // tn),
                in_specs=[
                    pl.BlockSpec((1, 1, tn), lambda b, n: (b, 0, n)),
                    pl.BlockSpec((1, 1, tn), lambda b, n: (b, 0, n)),
                ],
                out_specs=pl.BlockSpec((1, 8, 128), lambda b, n: (b, 0, 0)),
                scratch_shapes=[
                    pltpu.VMEM((K, K), jnp.float32),   # joint histogram accumulator
                ],
            ),
            compiler_params=pltpu.CompilerParams(
                dimension_semantics=("parallel", "arbitrary")),
        )(yt, yp)

        per_batch_mi = out[:, 0, 0]             # (B,)
        return -jnp.mean(per_batch_mi)          # final tiny reduction in glue


def _reference(y_true, y_pred, centers, preterm, max_clip):
    """Pure-JAX reference matching the PyTorch forward exactly."""
    def prob(y):
        y = jnp.clip(y * 0.5 + 0.5, 0.0, max_clip)
        y = y.reshape(y.shape[0], -1, 1)
        p = jnp.exp(-preterm * (y - centers.reshape(1, 1, -1)) ** 2)
        return p / jnp.sum(p, axis=-1, keepdims=True)

    Ia = prob(y_true)
    Ib = prob(y_pred)
    pab = jnp.einsum('bnk,bnl->bkl', Ia, Ib) / y_true.shape[1]
    pa = jnp.mean(Ia, axis=1, keepdims=True)
    pb = jnp.mean(Ib, axis=1, keepdims=True)
    papb = jnp.einsum('bik,bil->bkl', pa, pb) + 1e-6
    mi = jnp.sum(pab * jnp.log(pab / papb + 1e-6), axis=(1, 2))
    return -jnp.mean(mi)


if __name__ == "__main__":
    key = jax.random.PRNGKey(0)
    k1, k2 = jax.random.split(key)
    x_true = jax.random.normal(k1, (2, 4, 16, 16), dtype=jnp.float32)
    x_pred = jax.random.normal(k2, (2, 4, 16, 16), dtype=jnp.float32)

    mi_mod = MutualInformation2D(sigma_ratio=1.0, minval=0.0, maxval=1.0, num_bin=32)
    loss = jax.block_until_ready(mi_mod(x_true, x_pred))

    ref = jax.block_until_ready(
        _reference(x_true, x_pred, mi_mod.vol_bin_centers,
                   mi_mod.preterm, mi_mod.max_clip))

    # Approx reciprocal + bf16 MXU operands shift numerics at the ~1e-3 relative
    # level on a loss of magnitude ~1e3; tolerance loosened accordingly.
    np.testing.assert_allclose(np.asarray(loss), np.asarray(ref),
                               rtol=5e-3, atol=1e-3)
    print("KERNEL_OK")
</pallas_src>

<mosaic_0001>
module attributes {stable_mosaic.version = 11 : i64} {
  func.func @_mi_kernel(%arg0: i32, %arg1: i32, %arg2: memref<1x1x1024xf32, #tpu.memory_space<vmem>>, %arg3: memref<1x1x1024xf32, #tpu.memory_space<vmem>>, %arg4: memref<1x8x128xf32, #tpu.memory_space<vmem>>, %arg5: memref<32x32xf32, #tpu.memory_space<vmem>>) attributes {dimension_semantics = [#tpu.dimension_semantics<parallel>, #tpu.dimension_semantics<arbitrary>], iteration_bounds = array<i64: 2, 1>, scalar_prefetch = 0 : i64, scratch_operands = 1 : i64, tpu.core_type = #tpu.core_type<tc>, window_params = [{transform_indices = @transform_0, window_bounds = array<i64: 1, 1, 1024>}, {transform_indices = @transform_1, window_bounds = array<i64: 1, 1, 1024>}, {transform_indices = @transform_2, window_bounds = array<i64: 1, 8, 128>}]} {
    %c0_i32 = arith.constant 0 : i32
    %0 = arith.cmpi eq, %arg1, %c0_i32 : i32
    %1 = arith.extui %0 : i1 to i32
    %c0_i32_0 = arith.constant 0 : i32
    %2 = arith.cmpi ne, %1, %c0_i32_0 : i32
    scf.if %2 {
      %cst_26 = arith.constant 0.000000e+00 : f32
      %62 = vector.broadcast %cst_26 : f32 to vector<32x32xf32>
      %c0_27 = arith.constant 0 : index
      %c0_28 = arith.constant 0 : index
      %63 = vector.load %arg5[%c0_27, %c0_28] : memref<32x32xf32, #tpu.memory_space<vmem>>, vector<32x32xf32>
      tpu.vector_store %arg5[%c0_27, %c0_28], %62 {strides = array<i32>} : memref<32x32xf32, #tpu.memory_space<vmem>>, vector<32x32xf32>,
    } else {
    }
    %3 = tpu.iota {dimensions = array<i32: 0>} : vector<32x1xi32>
    %4 = arith.sitofp %3 : vector<32x1xi32> to vector<32x1xf32>
    %cst = arith.constant 0.0322580636 : f32
    %5 = vector.broadcast %cst : f32 to vector<32x1xf32>
    %6 = arith.mulf %5, %4 : vector<32x1xf32>
    %cst_1 = arith.constant 0.000000e+00 : f32
    %7 = vector.broadcast %cst_1 : f32 to vector<32x1xf32>
    %8 = arith.addf %7, %6 : vector<32x1xf32>
    %c0 = arith.constant 0 : index
    %c0_2 = arith.constant 0 : index
    %c0_3 = arith.constant 0 : index
    %9 = vector.load %arg2[%c0, %c0_2, %c0_3] : memref<1x1x1024xf32, #tpu.memory_space<vmem>>, vector<1x1x1024xf32>
    %10 = vector.shape_cast %9 : vector<1x1x1024xf32> to vector<1x1024xf32>
    %cst_4 = arith.constant 5.000000e-01 : f32
    %11 = vector.broadcast %cst_4 : f32 to vector<1x1024xf32>
    %12 = arith.mulf %10, %11 : vector<1x1024xf32>
    %cst_5 = arith.constant 5.000000e-01 : f32
    %13 = vector.broadcast %cst_5 : f32 to vector<1x1024xf32>
    %14 = arith.addf %12, %13 : vector<1x1024xf32>
    %cst_6 = arith.constant 0.000000e+00 : f32
    %cst_7 = arith.constant 1.000000e+00 : f32
    %15 = vector.broadcast %cst_6 : f32 to vector<1x1024xf32>
    %16 = arith.maximumf %15, %14 : vector<1x1024xf32>
    %17 = vector.broadcast %cst_7 : f32 to vector<1x1024xf32>
    %18 = arith.minimumf %17, %16 : vector<1x1024xf32>
    %19 = vector.broadcast %18 : vector<1x1024xf32> to vector<32x1024xf32>
    %20 = vector.broadcast %8 : vector<32x1xf32> to vector<32x1024xf32>
    %21 = arith.subf %19, %20 : vector<32x1024xf32>
    %22 = arith.mulf %21, %21 : vector<32x1024xf32>
    %cst_8 = arith.constant -480.500031 : f32
    %23 = vector.broadcast %cst_8 : f32 to vector<32x1024xf32>
    %24 = arith.mulf %23, %22 : vector<32x1024xf32>
    %25 = math.exp %24 : vector<32x1024xf32>
    %cst_9 = arith.constant dense<0.000000e+00> : vector<1024xf32>
    %26 = vector.multi_reduction <add>, %25, %cst_9 [0] : vector<32x1024xf32> to vector<1024xf32>
    %27 = vector.shape_cast %26 : vector<1024xf32> to vector<1x1024xf32>
    %28 = tpu.reciprocal %27 {approx = true} : vector<1x1024xf32> -> vector<1x1024xf32>
    %29 = vector.broadcast %28 : vector<1x1024xf32> to vector<32x1024xf32>
    %30 = arith.mulf %25, %29 : vector<32x1024xf32>
    %31 = arith.truncf %30 : vector<32x1024xf32> to vector<32x1024xbf16>
    %c0_10 = arith.constant 0 : index
    %c0_11 = arith.constant 0 : index
    %c0_12 = arith.constant 0 : index
    %32 = vector.load %arg3[%c0_10, %c0_11, %c0_12] : memref<1x1x1024xf32, #tpu.memory_space<vmem>>, vector<1x1x1024xf32>
    %33 = vector.shape_cast %32 : vector<1x1x1024xf32> to vector<1x1024xf32>
    %cst_13 = arith.constant 5.000000e-01 : f32
    %34 = vector.broadcast %cst_13 : f32 to vector<1x1024xf32>
    %35 = arith.mulf %33, %34 : vector<1x1024xf32>
    %cst_14 = arith.constant 5.000000e-01 : f32
    %36 = vector.broadcast %cst_14 : f32 to vector<1x1024xf32>
    %37 = arith.addf %35, %36 : vector<1x1024xf32>
    %cst_15 = arith.constant 0.000000e+00 : f32
    %cst_16 = arith.constant 1.000000e+00 : f32
    %38 = vector.broadcast %cst_15 : f32 to vector<1x1024xf32>
    %39 = arith.maximumf %38, %37 : vector<1x1024xf32>
    %40 = vector.broadcast %cst_16 : f32 to vector<1x1024xf32>
    %41 = arith.minimumf %40, %39 : vector<1x1024xf32>
    %42 = vector.broadcast %41 : vector<1x1024xf32> to vector<32x1024xf32>
    %43 = vector.broadcast %8 : vector<32x1xf32> to vector<32x1024xf32>
    %44 = arith.subf %42, %43 : vector<32x1024xf32>
    %45 = arith.mulf %44, %44 : vector<32x1024xf32>
    %cst_17 = arith.constant -480.500031 : f32
    %46 = vector.broadcast %cst_17 : f32 to vector<32x1024xf32>
    %47 = arith.mulf %46, %45 : vector<32x1024xf32>
    %48 = math.exp %47 : vector<32x1024xf32>
    %cst_18 = arith.constant dense<0.000000e+00> : vector<1024xf32>
    %49 = vector.multi_reduction <add>, %48, %cst_18 [0] : vector<32x1024xf32> to vector<1024xf32>
    %50 = vector.shape_cast %49 : vector<1024xf32> to vector<1x1024xf32>
    %51 = tpu.reciprocal %50 {approx = true} : vector<1x1024xf32> -> vector<1x1024xf32>
    %52 = vector.broadcast %51 : vector<1x1024xf32> to vector<32x1024xf32>
    %53 = arith.mulf %48, %52 : vector<32x1024xf32>
    %54 = arith.truncf %53 : vector<32x1024xf32> to vector<32x1024xbf16>
    %c0_19 = arith.constant 0 : index
    %c0_20 = arith.constant 0 : index
    %55 = vector.load %arg5[%c0_19, %c0_20] : memref<32x32xf32, #tpu.memory_space<vmem>>, vector<32x32xf32>
    %cst_21 = arith.constant dense<0.000000e+00> : vector<32x32xf32>
    %56 = tpu.matmul %31, %54, %cst_21 {dimension_numbers = #tpu.dot_dimension_numbers<[1], [1], [0], [0], [0, 0, 1, 0], [], []>} : vector<32x1024xbf16>, vector<32x1024xbf16>, vector<32x32xf32> -> vector<32x32xf32>
    %57 = arith.addf %55, %56 : vector<32x32xf32>
    %c0_22 = arith.constant 0 : index
    %c0_23 = arith.constant 0 : index
    %58 = vector.load %arg5[%c0_22, %c0_23] : memref<32x32xf32, #tpu.memory_space<vmem>>, vector<32x32xf32>
    tpu.vector_store %arg5[%c0_22, %c0_23], %57 {strides = array<i32>} : memref<32x32xf32, #tpu.memory_space<vmem>>, vector<32x32xf32>,
    %c0_i32_24 = arith.constant 0 : i32
    %59 = arith.cmpi eq, %arg1, %c0_i32_24 : i32
    %60 = arith.extui %59 : i1 to i32
    %c0_i32_25 = arith.constant 0 : i32
    %61 = arith.cmpi ne, %60, %c0_i32_25 : i32
    scf.if %61 {
      %c0_26 = arith.constant 0 : index
      %c0_27 = arith.constant 0 : index
      %62 = vector.load %arg5[%c0_26, %c0_27] : memref<32x32xf32, #tpu.memory_space<vmem>>, vector<32x32xf32>
      %cst_28 = arith.constant 4.000000e+00 : f32
      %63 = vector.broadcast %cst_28 : f32 to vector<32x32xf32>
      %64 = arith.divf %62, %63 : vector<32x32xf32>
      %cst_29 = arith.constant dense<0.000000e+00> : vector<32xf32>
      %65 = vector.multi_reduction <add>, %62, %cst_29 [1] : vector<32x32xf32> to vector<32xf32>
      %66 = vector.shape_cast %65 : vector<32xf32> to vector<32x1xf32>
      %cst_30 = arith.constant 9.765625E-4 : f32
      %67 = vector.broadcast %cst_30 : f32 to vector<32x1xf32>
      %68 = arith.mulf %66, %67 : vector<32x1xf32>
      %cst_31 = arith.constant dense<0.000000e+00> : vector<32xf32>
      %69 = vector.multi_reduction <add>, %62, %cst_31 [0] : vector<32x32xf32> to vector<32xf32>
      %70 = vector.shape_cast %69 : vector<32xf32> to vector<1x32xf32>
      %cst_32 = arith.constant 9.765625E-4 : f32
      %71 = vector.broadcast %cst_32 : f32 to vector<1x32xf32>
      %72 = arith.mulf %70, %71 : vector<1x32xf32>
      %73 = vector.broadcast %68 : vector<32x1xf32> to vector<32x32xf32>
      %74 = vector.broadcast %72 : vector<1x32xf32> to vector<32x32xf32>
      %75 = arith.mulf %73, %74 : vector<32x32xf32>
      %cst_33 = arith.constant 9.99999997E-7 : f32
      %76 = vector.broadcast %cst_33 : f32 to vector<32x32xf32>
      %77 = arith.addf %75, %76 : vector<32x32xf32>
      %78 = arith.divf %64, %77 : vector<32x32xf32>
      %cst_34 = arith.constant 9.99999997E-7 : f32
      %79 = vector.broadcast %cst_34 : f32 to vector<32x32xf32>
      %80 = arith.addf %78, %79 : vector<32x32xf32>
      %81 = math.log %80 : vector<32x32xf32>
      %82 = arith.mulf %64, %81 : vector<32x32xf32>
      %83 = vector.shape_cast %82 : vector<32x32xf32> to vector<1x32x32xf32>
      %cst_35 = arith.constant dense<0.000000e+00> : vector<1xf32>
      %84 = vector.multi_reduction <add>, %83, %cst_35 [1, 2] : vector<1x32x32xf32> to vector<1xf32>
      %85 = vector.shape_cast %84 : vector<1xf32> to vector<1x1x1xf32>
      %86 = vector.extract %85[0, 0, 0] : f32 from vector<1x1x1xf32>
      %87 = vector.broadcast %86 : f32 to vector<1x8x128xf32>
      %c0_36 = arith.constant 0 : index
      %c0_37 = arith.constant 0 : index
      %c0_38 = arith.constant 0 : index
      %88 = vector.load %arg4[%c0_36, %c0_37, %c0_38] : memref<1x8x128xf32, #tpu.memory_space<vmem>>, vector<1x8x128xf32>
      tpu.vector_store %arg4[%c0_36, %c0_37, %c0_38], %87 {strides = array<i32>} : memref<1x8x128xf32, #tpu.memory_space<vmem>>, vector<1x8x128xf32>,
    } else {
    }
    return
  }
  func.func @transform_0(%arg0: i32, %arg1: i32) -> (i32, i32, i32) {
    %c0_i32 = arith.constant 0 : i32
    %c0_i32_0 = arith.constant 0 : i32
    return %arg0, %c0_i32, %arg1 : i32, i32, i32
  }
  func.func @transform_1(%arg0: i32, %arg1: i32) -> (i32, i32, i32) {
    %c0_i32 = arith.constant 0 : i32
    %c0_i32_0 = arith.constant 0 : i32
    return %arg0, %c0_i32, %arg1 : i32, i32, i32
  }
  func.func @transform_2(%arg0: i32, %arg1: i32) -> (i32, i32, i32) {
    %c0_i32 = arith.constant 0 : i32
    %c0_i32_0 = arith.constant 0 : i32
    %c0_i32_1 = arith.constant 0 : i32
    return %arg0, %c0_i32, %c0_i32_0 : i32, i32, i32
  }
}

</mosaic_0001>

<llo_original>
// kernel: tpu_custom_call.1
$region0: #{tpu_custom_call.1}
  #allocation0 [shape = 'u32[]', space=smem, size = 0x4, offset = 0x4, fixed_abs, tag = 'smem constant byte address 0x4 - core index']
  #allocation1 [shape = 'u32[144,128]{1,0:T(1,128)}', space=vmem, size = 0x12000, scoped, tag = 'internal scratch']
  #allocation2 [shape = 'f32[32,32]{1,0:T(8,128)}', space=vmem, size = 0x4000, scoped, tag = 'scratch operand']
  %s0 = inlined_call_operand.hbm [shape: f32[2,1,1024], index: 0, kind: input, shape index: {}]
  %s1 = inlined_call_operand.hbm [shape: f32[2,1,1024], index: 1, kind: input, shape index: {}]
  %s2 = inlined_call_operand.hbm [shape: f32[2,8,128], index: 2, kind: output, shape index: {}]
  %s3 = sld [smem:[#allocation0]]
  $region57: #{tpu_custom_call.1} parent=0
    _
  %s5 = ssub.s32 1, %s3
  %s6 = scalar_select 0, %s5, %s3
  $region1: #{tpu_custom_call.1} parent=0
    #allocation3 [shape = 'u8[8192]{0}', space=vmem, size = 0x2000, scoped, tag = 'input window, operand 0']
    #allocation4 [shape = 's32[2]{0}', space=sflag, size = 0x8, scoped, tag = 'scoped memory for tpu_custom_call.1']
    #allocation5 [shape = 's32[2]{0}', space=sflag, size = 0x8, scoped, tag = 'scoped memory for tpu_custom_call.1']
    #allocation6 [shape = 'u8[8192]{0}', space=vmem, size = 0x2000, scoped, tag = 'input window, operand 1']
    #allocation7 [shape = 's32[2]{0}', space=sflag, size = 0x8, scoped, tag = 'scoped memory for tpu_custom_call.1']
    #allocation8 [shape = 'u8[8192]{0}', space=vmem, size = 0x2000, scoped, tag = 'output window, operand 0']
    %7 = vsyncpa [#allocation4], 0
    %s8 = scalar_lea.sflag [#allocation4], 1
    %9 = vsyncpa %s8, 0
    %10 = vsyncpa [#allocation7], 0
    %s11 = scalar_lea.sflag [#allocation7], 1
    %12 = vsyncpa %s11, 0
    %13 = vsyncpa [#allocation5], 0
    %s14 = scalar_lea.sflag [#allocation5], 1
    %15 = vsyncpa %s14, 0
    loop: start=0, step=1, limit=4
    $region2: #{tpu_custom_call.1} parent=1 // loop_pre_header
      _
    $region3: #{tpu_custom_call.1} parent=1 // loop_header
      %s17 = sphi 0, %s21
      %p18 = scmp.ge.s32.totalorder %s17, 4
      %s24 = sphi 0, %s36
      %s25 = sphi 0, %s32
      %s26 = sphi 0, %s24
      %s27 = sphi 0, %s25
      %s28 = sphi 0, %s26
      %s29 = sphi 0, %s27
      %s41 = sphi 0, %s43
      %s44 = sphi 0, %s41
      %s45 = sphi 0, %s44
      %s61 = sphi 0, %s45
      %s69 = sphi 0, %s71
      %s72 = sphi 0, %s69
      %s73 = sphi 0, %s72
      %s89 = sphi 0, %s73
      %s95 = sphi 0, %s97
      %s98 = sphi 0, %s95
      %s99 = sphi 0, %s98
      %s115 = sphi 0, %s99
    $region4: #{tpu_custom_call.1} parent=1 // loop_header_branch
      %20 = sbr.rel (%p18) target = $region8
    $region5: #{tpu_custom_call.1} parent=1 // loop_body
      %s22 = ssub.s32 %s17, 1
      %s23 = ssub.s32 %s17, 2
      %s30 = sadd.s32 1, %s25
      %p31 = scmp.ge.s32.totalorder %s30, 1
      %s32 = scalar_select %p31, 0, %s30
      %s33 = sadd.s32 1, %s24
      %s34 = scalar_select %p31, %s33, %s24
      %p35 = scmp.ge.s32.totalorder %s34, 2
      %s36 = scalar_select %p35, 0, %s34
      %s37 = ssub.s32 %s24, %s36
      %s38 = ssub.s32 %s25, %s32
      %s39 = sor.u32 %s37, %s38
      %p40 = scmp.eq.s32.totalorder %s39, 0
      %s42 = sadd.s32 %s41, 1
      %s43 = scalar_select %p40, %s41, %s42
      %p46 = pneg %p40
      %p47 = scmp.eq.s32.totalorder %s17, 1
      %p48 = por %p46, %p47
      %p49 = scmp.ne.s32.totalorder %s41, %s44
      %p50 = scmp.eq.s32.totalorder %s17, 0
      %p51 = por %p49, %p50
      %p52 = scmp.ne.s32.totalorder %s41, %s44
      %p53 = scmp.eq.s32.totalorder %s22, 1
      %p54 = por %p52, %p53
      %p55 = scmp.ne.s32.totalorder %s44, %s45
      %p56 = scmp.eq.s32.totalorder %s22, 0
      %p57 = por %p55, %p56
      %p58 = scmp.ne.s32.totalorder %s44, %s45
      %p59 = scmp.eq.s32.totalorder %s23, 1
      %p60 = por %p58, %p59
      %p62 = scmp.ne.s32.totalorder %s45, %s61
      %p63 = scmp.eq.s32.totalorder %s23, 0
      %p64 = por %p62, %p63
      %s65 = ssub.s32 %s24, %s36
      %s66 = ssub.s32 %s25, %s32
      %s67 = sor.u32 %s65, %s66
      %p68 = scmp.eq.s32.totalorder %s67, 0
      %s70 = sadd.s32 %s69, 1
      %s71 = scalar_select %p68, %s69, %s70
      %p74 = pneg %p68
      %p75 = scmp.eq.s32.totalorder %s17, 1
      %p76 = por %p74, %p75
      %p77 = scmp.ne.s32.totalorder %s69, %s72
      %p78 = scmp.eq.s32.totalorder %s17, 0
      %p79 = por %p77, %p78
      %p80 = scmp.ne.s32.totalorder %s69, %s72
      %p81 = scmp.eq.s32.totalorder %s22, 1
      %p82 = por %p80, %p81
      %p83 = scmp.ne.s32.totalorder %s72, %s73
      %p84 = scmp.eq.s32.totalorder %s22, 0
      %p85 = por %p83, %p84
      %p86 = scmp.ne.s32.totalorder %s72, %s73
      %p87 = scmp.eq.s32.totalorder %s23, 1
      %p88 = por %p86, %p87
      %p90 = scmp.ne.s32.totalorder %s73, %s89
      %p91 = scmp.eq.s32.totalorder %s23, 0
      %p92 = por %p90, %p91
      %s93 = ssub.s32 %s24, %s36
      %p94 = scmp.eq.s32.totalorder %s93, 0
      %s96 = sadd.s32 %s95, 1
      %s97 = scalar_select %p94, %s95, %s96
      %p100 = pneg %p94
      %p101 = scmp.eq.s32.totalorder %s17, 1
      %p102 = por %p100, %p101
      %p103 = scmp.ne.s32.totalorder %s95, %s98
      %p104 = scmp.eq.s32.totalorder %s17, 0
      %p105 = por %p103, %p104
      %p106 = scmp.ne.s32.totalorder %s95, %s98
      %p107 = scmp.eq.s32.totalorder %s22, 1
      %p108 = por %p106, %p107
      %p109 = scmp.ne.s32.totalorder %s98, %s99
      %p110 = scmp.eq.s32.totalorder %s22, 0
      %p111 = por %p109, %p110
      %p112 = scmp.ne.s32.totalorder %s98, %s99
      %p113 = scmp.eq.s32.totalorder %s23, 1
      %p114 = por %p112, %p113
      %p116 = scmp.ne.s32.totalorder %s99, %s115
      %p117 = scmp.eq.s32.totalorder %s23, 0
      %p118 = por %p116, %p117
      %p119 = scmp.le.s32.totalorder 1, %s17
      %p120 = scmp.lt.s32.totalorder %s17, 3
      %p121 = pnand %p119, %p120
      %p122 = pneg %p121
      // Predicated region
      $region9: #{tpu_custom_call.1} parent=5 // pred_check
        _
      $region10: #{tpu_custom_call.1} parent=5 // pred_check_branch
        %124 = sbr.rel (%p121) target = $region12
      $region11: #{tpu_custom_call.1} parent=5 // pred_region
        %s125 = ssub.s32 %s17, 1
      $region12: #{tpu_custom_call.1} parent=5 // pred_fallthru
        _
      %p126 = scmp.lt.s32.totalorder %s17, 2
      // Predicated region
      $region13: #{tpu_custom_call.1} parent=5 // pred_check
        %p127 = pneg %p126
      $region14: #{tpu_custom_call.1} parent=5 // pred_check_branch
        %129 = sbr.rel (%p127) target = $region16
      $region15: #{tpu_custom_call.1} parent=5 // pred_region
        // Predicated region
        $region17: #{tpu_custom_call.1} parent=15 // pred_check
          %p130 = pneg %p51
        $region18: #{tpu_custom_call.1} parent=15 // pred_check_branch
          %132 = sbr.rel (%p130) target = $region20
        $region19: #{tpu_custom_call.1} parent=15 // pred_region
          %s133 = sand.u32 %s41, 1
          %s134 = scalar_lea.sflag [#allocation4], %s133
          %s135 = sand.u32 %s41, 1
          %s136 = smul.addr %s135, 8
          %s137 = scalar_lea.vmem [#allocation3], %s136
          %s138 = smul.u32 8, %s25
          %s140 = ssub.s32 128, 128
          %141 = vsyncadd %s134, %s140
          %s142 = smul.addr %s24, 8
          %s143 = sadd.s32 %s138, %s142
          %s144 = smul.addr %s143, 16
          %s145 = scalar_lea.hbm %s0, %s144
          %s147 = sshll.u32 %s137, 4
          %s148 = int_to_ptr.vmem [resolvable:$true] %s147
          %150 = dma.hbm_to_vmem [thread:$0]  %s145, 128, %s148, %s134
        $region20: #{tpu_custom_call.1} parent=15 // pred_fallthru
          _
        // Predicated region
        $region21: #{tpu_custom_call.1} parent=15 // pred_check
          %p151 = pneg %p79
        $region22: #{tpu_custom_call.1} parent=15 // pred_check_branch
          %153 = sbr.rel (%p151) target = $region24
        $region23: #{tpu_custom_call.1} parent=15 // pred_region
          %s154 = sand.u32 %s69, 1
          %s155 = scalar_lea.sflag [#allocation7], %s154
          %s156 = sand.u32 %s69, 1
          %s157 = smul.addr %s156, 8
          %s158 = scalar_lea.vmem [#allocation6], %s157
          %s159 = smul.u32 8, %s25
          %s161 = ssub.s32 128, 128
          %162 = vsyncadd %s155, %s161
          %s163 = smul.addr %s24, 8
          %s164 = sadd.s32 %s159, %s163
          %s165 = smul.addr %s164, 16
          %s166 = scalar_lea.hbm %s1, %s165
          %s168 = sshll.u32 %s158, 4
          %s169 = int_to_ptr.vmem [resolvable:$true] %s168
          %171 = dma.hbm_to_vmem [thread:$0]  %s166, 128, %s169, %s155
        $region24: #{tpu_custom_call.1} parent=15 // pred_fallthru
          _
      $region16: #{tpu_custom_call.1} parent=5 // pred_fallthru
        _
      %p172 = scmp.le.s32.totalorder 1, %s17
      %p173 = scmp.lt.s32.totalorder %s17, 3
      %p174 = pnand %p172, %p173
      %p175 = pneg %p174
      // Predicated region
      $region25: #{tpu_custom_call.1} parent=5 // pred_check
        _
      $region26: #{tpu_custom_call.1} parent=5 // pred_check_branch
        %177 = sbr.rel (%p174) target = $region28
      $region27: #{tpu_custom_call.1} parent=5 // pred_region
        %s178 = ssub.s32 %s17, 1
        %s179 = sand.u32 %s44, 1
        %s180 = scalar_lea.sflag [#allocation4], %s179
        %s181 = sand.u32 %s44, 1
        %s182 = smul.addr %s181, 8
        %s183 = scalar_lea.vmem [#allocation3], %s182
        // Predicated region
        $region29: #{tpu_custom_call.1} parent=27 // pred_check
          %p184 = pneg %p57
        $region30: #{tpu_custom_call.1} parent=27 // pred_check_branch
          %186 = sbr.rel (%p184) target = $region32
        $region31: #{tpu_custom_call.1} parent=27 // pred_region
          %187 = dma.done %s180, 128
        $region32: #{tpu_custom_call.1} parent=27 // pred_fallthru
          _
        %s188 = sand.u32 %s72, 1
        %s189 = scalar_lea.sflag [#allocation7], %s188
        %s190 = sand.u32 %s72, 1
        %s191 = smul.addr %s190, 8
        %s192 = scalar_lea.vmem [#allocation6], %s191
        // Predicated region
        $region33: #{tpu_custom_call.1} parent=27 // pred_check
          %p193 = pneg %p85
        $region34: #{tpu_custom_call.1} parent=27 // pred_check_branch
          %195 = sbr.rel (%p193) target = $region36
        $region35: #{tpu_custom_call.1} parent=27 // pred_region
          %196 = dma.done %s189, 128
        $region36: #{tpu_custom_call.1} parent=27 // pred_fallthru
          _
        %s197 = sand.u32 %s44, 1
        %s198 = scalar_lea.sflag [#allocation4], %s197
        %s199 = sand.u32 %s44, 1
        %s200 = smul.addr %s199, 8
        %s201 = scalar_lea.vmem [#allocation3], %s200
        %p202 = pneg %p57
        %p203 = pneg %p54
        %s204 = sand.u32 %s72, 1
        %s205 = scalar_lea.sflag [#allocation7], %s204
        %s206 = sand.u32 %s72, 1
        %s207 = smul.addr %s206, 8
        %s208 = scalar_lea.vmem [#allocation6], %s207
        %p209 = pneg %p85
        %p210 = pneg %p82
        %p211 = pneg %p111
        %p212 = pneg %p108
        %s213 = sand.u32 %s98, 1
        %s214 = scalar_lea.sflag [#allocation5], %s213
        %s215 = sand.u32 %s98, 1
        %s216 = smul.addr %s215, 8
        %s217 = scalar_lea.vmem [#allocation8], %s216
        %s218 = smul.u32 8, %s27
        %s219 = smul.u32 8, %s27
        %p221 = scmp.eq.s32.totalorder %s27, 0
        // Predicated region
        $region37: #{tpu_custom_call.1} parent=27 // pred_check
          %p222 = pneg %p221
        $region38: #{tpu_custom_call.1} parent=27 // pred_check_branch
          %224 = sbr.rel (%p222) target = $region40
        $region39: #{tpu_custom_call.1} parent=27 // pred_region
          %vm225 = vcmask 261120
          %226 = vst.msk [vmem:[#allocation2] sm:$0xff] %vm225, 0.0
          %227 = vst.msk [vmem:[#allocation2 + $0x8] sm:$0xff] %vm225, 0.0
          %228 = vst.msk [vmem:[#allocation2 + $0x10] sm:$0xff] %vm225, 0.0
          %229 = vst.msk [vmem:[#allocation2 + $0x18] sm:$0xff] %vm225, 0.0
        $region40: #{tpu_custom_call.1} parent=27 // pred_fallthru
          _
        %v230 = vlaneseq
        %v231 = vshrl.u32 %v230, 7
        %v232 = vadd.s32 %v231, 8
        %v233 = vadd.s32 %v231, 16
        %v234 = vadd.s32 %v231, 24
        %v235 = vcvt.s32.f32 %v231
        %v236 = vcvt.s32.f32 %v232
        %v237 = vcvt.s32.f32 %v233
        %v238 = vcvt.s32.f32 %v234
        %v239 = vmul.f32 %v235, 0.032258064
        %v240 = vmul.f32 %v236, 0.032258064
        %v241 = vmul.f32 %v237, 0.032258064
        %v242 = vmul.f32 %v238, 0.032258064
        %v243 = vadd.f32 %v239, 0.0
        %v244 = vadd.f32 %v240, 0.0
        %v245 = vadd.f32 %v241, 0.0
        %v246 = vadd.f32 %v242, 0.0
        %v247 = vld [vmem:[%s183] sm:$0xff]
        %v248 = vmul.f32 %v247, 0.5
        %v249 = vadd.f32 %v248, 0.5
        %v250 = vmax.f32 %v249, 0.0
        %v251 = vmin.f32 %v250, 1.0
        %v253 = vlaneseq
        %v254 = vshrl.u32 %v253, 7
        %v255 = vsub.s32 0, %v254
        %v256 = vrot.slane %v251, %v255
        %v257 = vlaneseq
        %v258 = vshrl.u32 %v257, 7
        %v259 = vsub.s32 1, %v258
        %v260 = vrot.slane %v251, %v259
        %v261 = vlaneseq
        %v262 = vshrl.u32 %v261, 7
        %v263 = vsub.s32 2, %v262
        %v264 = vrot.slane %v251, %v263
        %v265 = vlaneseq
        %v266 = vshrl.u32 %v265, 7
        %v267 = vsub.s32 3, %v266
        %v268 = vrot.slane %v251, %v267
        %v269 = vlaneseq
        %v270 = vshrl.u32 %v269, 7
        %v271 = vsub.s32 4, %v270
        %v272 = vrot.slane %v251, %v271
        %v273 = vlaneseq
        %v274 = vshrl.u32 %v273, 7
        %v275 = vsub.s32 5, %v274
        %v276 = vrot.slane %v251, %v275
        %v277 = vlaneseq
        %v278 = vshrl.u32 %v277, 7
        %v279 = vsub.s32 6, %v278
        %v280 = vrot.slane %v251, %v279
        %v281 = vlaneseq
        %v282 = vshrl.u32 %v281, 7
        %v283 = vsub.s32 7, %v282
        %v284 = vrot.slane %v251, %v283
        %v293 = vsub.f32 %v256, %v243
        %v294 = vsub.f32 %v260, %v243
        %v295 = vsub.f32 %v264, %v243
        %v296 = vsub.f32 %v268, %v243
        %v297 = vsub.f32 %v272, %v243
        %v298 = vsub.f32 %v276, %v243
        %v299 = vsub.f32 %v280, %v243
        %v300 = vsub.f32 %v284, %v243
        %v301 = vsub.f32 %v256, %v244
        %v302 = vsub.f32 %v260, %v244
        %v303 = vsub.f32 %v264, %v244
        %v304 = vsub.f32 %v268, %v244
        %v305 = vsub.f32 %v272, %v244
        %v306 = vsub.f32 %v276, %v244
        %v307 = vsub.f32 %v280, %v244
        %v308 = vsub.f32 %v284, %v244
        %v309 = vsub.f32 %v256, %v245
        %v310 = vsub.f32 %v260, %v245
        %v311 = vsub.f32 %v264, %v245
        %v312 = vsub.f32 %v268, %v245
        %v313 = vsub.f32 %v272, %v245
        %v314 = vsub.f32 %v276, %v245
        %v315 = vsub.f32 %v280, %v245
        %v316 = vsub.f32 %v284, %v245
        %v317 = vsub.f32 %v256, %v246
        %v318 = vsub.f32 %v260, %v246
        %v319 = vsub.f32 %v264, %v246
        %v320 = vsub.f32 %v268, %v246
        %v321 = vsub.f32 %v272, %v246
        %v322 = vsub.f32 %v276, %v246
        %v323 = vsub.f32 %v280, %v246
        %v324 = vsub.f32 %v284, %v246
        %v325 = vmul.f32 %v293, %v293
        %v326 = vmul.f32 %v294, %v294
        %v327 = vmul.f32 %v295, %v295
        %v328 = vmul.f32 %v296, %v296
        %v329 = vmul.f32 %v297, %v297
        %v330 = vmul.f32 %v298, %v298
        %v331 = vmul.f32 %v299, %v299
        %v332 = vmul.f32 %v300, %v300
        %v333 = vmul.f32 %v301, %v301
        %v334 = vmul.f32 %v302, %v302
        %v335 = vmul.f32 %v303, %v303
        %v336 = vmul.f32 %v304, %v304
        %v337 = vmul.f32 %v305, %v305
        %v338 = vmul.f32 %v306, %v306
        %v339 = vmul.f32 %v307, %v307
        %v340 = vmul.f32 %v308, %v308
        %v341 = vmul.f32 %v309, %v309
        %v342 = vmul.f32 %v310, %v310
        %v343 = vmul.f32 %v311, %v311
        %v344 = vmul.f32 %v312, %v312
        %v345 = vmul.f32 %v313, %v313
        %v346 = vmul.f32 %v314, %v314
        %v347 = vmul.f32 %v315, %v315
        %v348 = vmul.f32 %v316, %v316
        %v349 = vmul.f32 %v317, %v317
        %v350 = vmul.f32 %v318, %v318
        %v351 = vmul.f32 %v319, %v319
        %v352 = vmul.f32 %v320, %v320
        %v353 = vmul.f32 %v321, %v321
        %v354 = vmul.f32 %v322, %v322
        %v355 = vmul.f32 %v323, %v323
        %v356 = vmul.f32 %v324, %v324
        %v357 = vmul.f32 %v325, -480.50003
        %v358 = vmul.f32 %v326, -480.50003
        %v359 = vmul.f32 %v327, -480.50003
        %v360 = vmul.f32 %v328, -480.50003
        %v361 = vmul.f32 %v329, -480.50003
        %v362 = vmul.f32 %v330, -480.50003
        %v363 = vmul.f32 %v331, -480.50003
        %v364 = vmul.f32 %v332, -480.50003
        %v365 = vmul.f32 %v333, -480.50003
        %v366 = vmul.f32 %v334, -480.50003
        %v367 = vmul.f32 %v335, -480.50003
        %v368 = vmul.f32 %v336, -480.50003
        %v369 = vmul.f32 %v337, -480.50003
        %v370 = vmul.f32 %v338, -480.50003
        %v371 = vmul.f32 %v339, -480.50003
        %v372 = vmul.f32 %v340, -480.50003
        %v373 = vmul.f32 %v341, -480.50003
        %v374 = vmul.f32 %v342, -480.50003
        %v375 = vmul.f32 %v343, -480.50003
        %v376 = vmul.f32 %v344, -480.50003
        %v377 = vmul.f32 %v345, -480.50003
        %v378 = vmul.f32 %v346, -480.50003
        %v379 = vmul.f32 %v347, -480.50003
        %v380 = vmul.f32 %v348, -480.50003
        %v381 = vmul.f32 %v349, -480.50003
        %v382 = vmul.f32 %v350, -480.50003
        %v383 = vmul.f32 %v351, -480.50003
        %v384 = vmul.f32 %v352, -480.50003
        %v385 = vmul.f32 %v353, -480.50003
        %v386 = vmul.f32 %v354, -480.50003
        %v387 = vmul.f32 %v355, -480.50003
        %v388 = vmul.f32 %v356, -480.50003
        %v389 = vmul.f32 %v357, 1.442695
        %v390 = vpow.pop %v389
        %v391 = vmul.f32 %v358, 1.442695
        %v392 = vpow.pop %v391
        %v393 = vmul.f32 %v359, 1.442695
        %v394 = vpow.pop %v393
        %v395 = vmul.f32 %v360, 1.442695
        %v396 = vpow.pop %v395
        %v397 = vmul.f32 %v361, 1.442695
        %v398 = vpow.pop %v397
        %v399 = vmul.f32 %v362, 1.442695
        %v400 = vpow.pop %v399
        %v401 = vmul.f32 %v363, 1.442695
        %v402 = vpow.pop %v401
        %v403 = vmul.f32 %v364, 1.442695
        %v404 = vpow.pop %v403
        %v405 = vmul.f32 %v365, 1.442695
        %v406 = vpow.pop %v405
        %v407 = vmul.f32 %v366, 1.442695
        %v408 = vpow.pop %v407
        %v409 = vmul.f32 %v367, 1.442695
        %v410 = vpow.pop %v409
        %v411 = vmul.f32 %v368, 1.442695
        %v412 = vpow.pop %v411
        %v413 = vmul.f32 %v369, 1.442695
        %v414 = vpow.pop %v413
        %v415 = vmul.f32 %v370, 1.442695
        %v416 = vpow.pop %v415
        %v417 = vmul.f32 %v371, 1.442695
        %v418 = vpow.pop %v417
        %v419 = vmul.f32 %v372, 1.442695
        %v420 = vpow.pop %v419
        %v421 = vmul.f32 %v373, 1.442695
        %v422 = vpow.pop %v421
        %v423 = vmul.f32 %v374, 1.442695
        %v424 = vpow.pop %v423
        %v425 = vmul.f32 %v375, 1.442695
        %v426 = vpow.pop %v425
        %v427 = vmul.f32 %v376, 1.442695
        %v428 = vpow.pop %v427
        %v429 = vmul.f32 %v377, 1.442695
        %v430 = vpow.pop %v429
        %v431 = vmul.f32 %v378, 1.442695
        %v432 = vpow.pop %v431
        %v433 = vmul.f32 %v379, 1.442695
        %v434 = vpow.pop %v433
        %v435 = vmul.f32 %v380, 1.442695
        %v436 = vpow.pop %v435
        %v437 = vmul.f32 %v381, 1.442695
        %v438 = vpow.pop %v437
        %v439 = vmul.f32 %v382, 1.442695
        %v440 = vpow.pop %v439
        %v441 = vmul.f32 %v383, 1.442695
        %v442 = vpow.pop %v441
        %v443 = vmul.f32 %v384, 1.442695
        %v444 = vpow.pop %v443
        %v445 = vmul.f32 %v385, 1.442695
        %v446 = vpow.pop %v445
        %v447 = vmul.f32 %v386, 1.442695
        %v448 = vpow.pop %v447
        %v449 = vmul.f32 %v387, 1.442695
        %v450 = vpow.pop %v449
        %v451 = vmul.f32 %v388, 1.442695
        %v452 = vpow.pop %v451
        %v453 = vadd.f32 %v390, %v406
        %v454 = vadd.f32 %v453, %v422
        %v455 = vadd.f32 %v454, %v438
        %v456 = vrot.slane %v455, 4
        %v457 = vadd.f32 %v455, %v456
        %v458 = vrot.slane %v457, 2
        %v459 = vadd.f32 %v457, %v458
        %v460 = vrot.slane %v459, 1
        %v461 = vadd.f32 %v459, %v460
        %v462 = vadd.f32 %v392, %v408
        %v463 = vadd.f32 %v462, %v424
        %v464 = vadd.f32 %v463, %v440
        %v465 = vrot.slane %v464, 4
        %v466 = vadd.f32 %v464, %v465
        %v467 = vrot.slane %v466, 2
        %v468 = vadd.f32 %v466, %v467
        %v469 = vrot.slane %v468, 1
        %v470 = vadd.f32 %v468, %v469
        %v471 = vadd.f32 %v394, %v410
        %v472 = vadd.f32 %v471, %v426
        %v473 = vadd.f32 %v472, %v442
        %v474 = vrot.slane %v473, 4
        %v475 = vadd.f32 %v473, %v474
        %v476 = vrot.slane %v475, 2
        %v477 = vadd.f32 %v475, %v476
        %v478 = vrot.slane %v477, 1
        %v479 = vadd.f32 %v477, %v478
        %v480 = vadd.f32 %v396, %v412
        %v481 = vadd.f32 %v480, %v428
        %v482 = vadd.f32 %v481, %v444
        %v483 = vrot.slane %v482, 4
        %v484 = vadd.f32 %v482, %v483
        %v485 = vrot.slane %v484, 2
        %v486 = vadd.f32 %v484, %v485
        %v487 = vrot.slane %v486, 1
        %v488 = vadd.f32 %v486, %v487
        %v489 = vadd.f32 %v398, %v414
        %v490 = vadd.f32 %v489, %v430
        %v491 = vadd.f32 %v490, %v446
        %v492 = vrot.slane %v491, 4
        %v493 = vadd.f32 %v491, %v492
        %v494 = vrot.slane %v493, 2
        %v495 = vadd.f32 %v493, %v494
        %v496 = vrot.slane %v495, 1
        %v497 = vadd.f32 %v495, %v496
        %v498 = vadd.f32 %v400, %v416
        %v499 = vadd.f32 %v498, %v432
        %v500 = vadd.f32 %v499, %v448
        %v501 = vrot.slane %v500, 4
        %v502 = vadd.f32 %v500, %v501
        %v503 = vrot.slane %v502, 2
        %v504 = vadd.f32 %v502, %v503
        %v505 = vrot.slane %v504, 1
        %v506 = vadd.f32 %v504, %v505
        %v507 = vadd.f32 %v402, %v418
        %v508 = vadd.f32 %v507, %v434
        %v509 = vadd.f32 %v508, %v450
        %v510 = vrot.slane %v509, 4
        %v511 = vadd.f32 %v509, %v510
        %v512 = vrot.slane %v511, 2
        %v513 = vadd.f32 %v511, %v512
        %v514 = vrot.slane %v513, 1
        %v515 = vadd.f32 %v513, %v514
        %v516 = vadd.f32 %v404, %v420
        %v517 = vadd.f32 %v516, %v436
        %v518 = vadd.f32 %v517, %v452
        %v519 = vrot.slane %v518, 4
        %v520 = vadd.f32 %v518, %v519
        %v521 = vrot.slane %v520, 2
        %v522 = vadd.f32 %v520, %v521
        %v523 = vrot.slane %v522, 1
        %v524 = vadd.f32 %v522, %v523
        %v525 = vrcp.pop %v461
        %v526 = vrcp.pop %v470
        %v527 = vrcp.pop %v479
        %v528 = vrcp.pop %v488
        %v529 = vrcp.pop %v497
        %v530 = vrcp.pop %v506
        %v531 = vrcp.pop %v515
        %v532 = vrcp.pop %v524
        %v533 = vmul.f32 %v390, %v525
        %v534 = vmul.f32 %v392, %v526
        %v535 = vmul.f32 %v394, %v527
        %v536 = vmul.f32 %v396, %v528
        %v537 = vmul.f32 %v398, %v529
        %v538 = vmul.f32 %v400, %v530
        %v539 = vmul.f32 %v402, %v531
        %v540 = vmul.f32 %v404, %v532
        %v541 = vmul.f32 %v406, %v525
        %v542 = vmul.f32 %v408, %v526
        %v543 = vmul.f32 %v410, %v527
        %v544 = vmul.f32 %v412, %v528
        %v545 = vmul.f32 %v414, %v529
        %v546 = vmul.f32 %v416, %v530
        %v547 = vmul.f32 %v418, %v531
        %v548 = vmul.f32 %v420, %v532
        %v549 = vmul.f32 %v422, %v525
        %v550 = vmul.f32 %v424, %v526
        %v551 = vmul.f32 %v426, %v527
        %v552 = vmul.f32 %v428, %v528
        %v553 = vmul.f32 %v430, %v529
        %v554 = vmul.f32 %v432, %v530
        %v555 = vmul.f32 %v434, %v531
        %v556 = vmul.f32 %v436, %v532
        %v557 = vmul.f32 %v438, %v525
        %v558 = vmul.f32 %v440, %v526
        %v559 = vmul.f32 %v442, %v527
        %v560 = vmul.f32 %v444, %v528
        %v561 = vmul.f32 %v446, %v529
        %v562 = vmul.f32 %v448, %v530
        %v563 = vmul.f32 %v450, %v531
        %v564 = vmul.f32 %v452, %v532
        %v565 = vpack.c.bf16 %v541, %v533
        %v566 = vpack.c.bf16 %v542, %v534
        %v567 = vpack.c.bf16 %v543, %v535
        %v568 = vpack.c.bf16 %v544, %v536
        %v569 = vpack.c.bf16 %v545, %v537
        %v570 = vpack.c.bf16 %v546, %v538
        %v571 = vpack.c.bf16 %v547, %v539
        %v572 = vpack.c.bf16 %v548, %v540
        %v573 = vpack.c.bf16 %v557, %v549
        %v574 = vpack.c.bf16 %v558, %v550
        %v575 = vpack.c.bf16 %v559, %v551
        %v576 = vpack.c.bf16 %v560, %v552
        %v577 = vpack.c.bf16 %v561, %v553
        %v578 = vpack.c.bf16 %v562, %v554
        %v579 = vpack.c.bf16 %v563, %v555
        %v580 = vpack.c.bf16 %v564, %v556
        %v581 = vld [vmem:[%s192] sm:$0xff]
        %v582 = vmul.f32 %v581, 0.5
        %v583 = vadd.f32 %v582, 0.5
        %v584 = vmax.f32 %v583, 0.0
        %v585 = vmin.f32 %v584, 1.0
        %v587 = vlaneseq
        %v588 = vshrl.u32 %v587, 7
        %v589 = vsub.s32 0, %v588
        %v590 = vrot.slane %v585, %v589
        %v591 = vlaneseq
        %v592 = vshrl.u32 %v591, 7
        %v593 = vsub.s32 1, %v592
        %v594 = vrot.slane %v585, %v593
        %v595 = vlaneseq
        %v596 = vshrl.u32 %v595, 7
        %v597 = vsub.s32 2, %v596
        %v598 = vrot.slane %v585, %v597
        %v599 = vlaneseq
        %v600 = vshrl.u32 %v599, 7
        %v601 = vsub.s32 3, %v600
        %v602 = vrot.slane %v585, %v601
        %v603 = vlaneseq
        %v604 = vshrl.u32 %v603, 7
        %v605 = vsub.s32 4, %v604
        %v606 = vrot.slane %v585, %v605
        %v607 = vlaneseq
        %v608 = vshrl.u32 %v607, 7
        %v609 = vsub.s32 5, %v608
        %v610 = vrot.slane %v585, %v609
        %v611 = vlaneseq
        %v612 = vshrl.u32 %v611, 7
        %v613 = vsub.s32 6, %v612
        %v614 = vrot.slane %v585, %v613
        %v615 = vlaneseq
        %v616 = vshrl.u32 %v615, 7
        %v617 = vsub.s32 7, %v616
        %v618 = vrot.slane %v585, %v617
        %v627 = vsub.f32 %v590, %v243
        %v628 = vsub.f32 %v594, %v243
        %v629 = vsub.f32 %v598, %v243
        %v630 = vsub.f32 %v602, %v243
        %v631 = vsub.f32 %v606, %v243
        %v632 = vsub.f32 %v610, %v243
        %v633 = vsub.f32 %v614, %v243
        %v634 = vsub.f32 %v618, %v243
        %v635 = vsub.f32 %v590, %v244
        %v636 = vsub.f32 %v594, %v244
        %v637 = vsub.f32 %v598, %v244
        %v638 = vsub.f32 %v602, %v244
        %v639 = vsub.f32 %v606, %v244
        %v640 = vsub.f32 %v610, %v244
        %v641 = vsub.f32 %v614, %v244
        %v642 = vsub.f32 %v618, %v244
        %v643 = vsub.f32 %v590, %v245
        %v644 = vsub.f32 %v594, %v245
        %v645 = vsub.f32 %v598, %v245
        %v646 = vsub.f32 %v602, %v245
        %v647 = vsub.f32 %v606, %v245
        %v648 = vsub.f32 %v610, %v245
        %v649 = vsub.f32 %v614, %v245
        %v650 = vsub.f32 %v618, %v245
        %v651 = vsub.f32 %v590, %v246
        %v652 = vsub.f32 %v594, %v246
        %v653 = vsub.f32 %v598, %v246
        %v654 = vsub.f32 %v602, %v246
        %v655 = vsub.f32 %v606, %v246
        %v656 = vsub.f32 %v610, %v246
        %v657 = vsub.f32 %v614, %v246
        %v658 = vsub.f32 %v618, %v246
        %v659 = vmul.f32 %v627, %v627
        %v660 = vmul.f32 %v628, %v628
        %v661 = vmul.f32 %v629, %v629
        %v662 = vmul.f32 %v630, %v630
        %v663 = vmul.f32 %v631, %v631
        %v664 = vmul.f32 %v632, %v632
        %v665 = vmul.f32 %v633, %v633
        %v666 = vmul.f32 %v634, %v634
        %v667 = vmul.f32 %v635, %v635
        %v668 = vmul.f32 %v636, %v636
        %v669 = vmul.f32 %v637, %v637
        %v670 = vmul.f32 %v638, %v638
        %v671 = vmul.f32 %v639, %v639
        %v672 = vmul.f32 %v640, %v640
        %v673 = vmul.f32 %v641, %v641
        %v674 = vmul.f32 %v642, %v642
        %v675 = vmul.f32 %v643, %v643
        %v676 = vmul.f32 %v644, %v644
        %v677 = vmul.f32 %v645, %v645
        %v678 = vmul.f32 %v646, %v646
        %v679 = vmul.f32 %v647, %v647
        %v680 = vmul.f32 %v648, %v648
        %v681 = vmul.f32 %v649, %v649
        %v682 = vmul.f32 %v650, %v650
        %v683 = vmul.f32 %v651, %v651
        %v684 = vmul.f32 %v652, %v652
        %v685 = vmul.f32 %v653, %v653
        %v686 = vmul.f32 %v654, %v654
        %v687 = vmul.f32 %v655, %v655
        %v688 = vmul.f32 %v656, %v656
        %v689 = vmul.f32 %v657, %v657
        %v690 = vmul.f32 %v658, %v658
        %v691 = vmul.f32 %v659, -480.50003
        %v692 = vmul.f32 %v660, -480.50003
        %v693 = vmul.f32 %v661, -480.50003
        %v694 = vmul.f32 %v662, -480.50003
        %v695 = vmul.f32 %v663, -480.50003
        %v696 = vmul.f32 %v664, -480.50003
        %v697 = vmul.f32 %v665, -480.50003
        %v698 = vmul.f32 %v666, -480.50003
        %v699 = vmul.f32 %v667, -480.50003
        %v700 = vmul.f32 %v668, -480.50003
        %v701 = vmul.f32 %v669, -480.50003
        %v702 = vmul.f32 %v670, -480.50003
        %v703 = vmul.f32 %v671, -480.50003
        %v704 = vmul.f32 %v672, -480.50003
        %v705 = vmul.f32 %v673, -480.50003
        %v706 = vmul.f32 %v674, -480.50003
        %v707 = vmul.f32 %v675, -480.50003
        %v708 = vmul.f32 %v676, -480.50003
        %v709 = vmul.f32 %v677, -480.50003
        %v710 = vmul.f32 %v678, -480.50003
        %v711 = vmul.f32 %v679, -480.50003
        %v712 = vmul.f32 %v680, -480.50003
        %v713 = vmul.f32 %v681, -480.50003
        %v714 = vmul.f32 %v682, -480.50003
        %v715 = vmul.f32 %v683, -480.50003
        %v716 = vmul.f32 %v684, -480.50003
        %v717 = vmul.f32 %v685, -480.50003
        %v718 = vmul.f32 %v686, -480.50003
        %v719 = vmul.f32 %v687, -480.50003
        %v720 = vmul.f32 %v688, -480.50003
        %v721 = vmul.f32 %v689, -480.50003
        %v722 = vmul.f32 %v690, -480.50003
        %v723 = vmul.f32 %v691, 1.442695
        %v724 = vpow.pop %v723
        %v725 = vmul.f32 %v692, 1.442695
        %v726 = vpow.pop %v725
        %v727 = vmul.f32 %v693, 1.442695
        %v728 = vpow.pop %v727
        %v729 = vmul.f32 %v694, 1.442695
        %v730 = vpow.pop %v729
        %v731 = vmul.f32 %v695, 1.442695
        %v732 = vpow.pop %v731
        %v733 = vmul.f32 %v696, 1.442695
        %v734 = vpow.pop %v733
        %v735 = vmul.f32 %v697, 1.442695
        %v736 = vpow.pop %v735
        %v737 = vmul.f32 %v698, 1.442695
        %v738 = vpow.pop %v737
        %v739 = vmul.f32 %v699, 1.442695
        %v740 = vpow.pop %v739
        %v741 = vmul.f32 %v700, 1.442695
        %v742 = vpow.pop %v741
        %v743 = vmul.f32 %v701, 1.442695
        %v744 = vpow.pop %v743
        %v745 = vmul.f32 %v702, 1.442695
        %v746 = vpow.pop %v745
        %v747 = vmul.f32 %v703, 1.442695
        %v748 = vpow.pop %v747
        %v749 = vmul.f32 %v704, 1.442695
        %v750 = vpow.pop %v749
        %v751 = vmul.f32 %v705, 1.442695
        %v752 = vpow.pop %v751
        %v753 = vmul.f32 %v706, 1.442695
        %v754 = vpow.pop %v753
        %v755 = vmul.f32 %v707, 1.442695
        %v756 = vpow.pop %v755
        %v757 = vmul.f32 %v708, 1.442695
        %v758 = vpow.pop %v757
        %v759 = vmul.f32 %v709, 1.442695
        %v760 = vpow.pop %v759
        %v761 = vmul.f32 %v710, 1.442695
        %v762 = vpow.pop %v761
        %v763 = vmul.f32 %v711, 1.442695
        %v764 = vpow.pop %v763
        %v765 = vmul.f32 %v712, 1.442695
        %v766 = vpow.pop %v765
        %v767 = vmul.f32 %v713, 1.442695
        %v768 = vpow.pop %v767
        %v769 = vmul.f32 %v714, 1.442695
        %v770 = vpow.pop %v769
        %v771 = vmul.f32 %v715, 1.442695
        %v772 = vpow.pop %v771
        %v773 = vmul.f32 %v716, 1.442695
        %v774 = vpow.pop %v773
        %v775 = vmul.f32 %v717, 1.442695
        %v776 = vpow.pop %v775
        %v777 = vmul.f32 %v718, 1.442695
        %v778 = vpow.pop %v777
        %v779 = vmul.f32 %v719, 1.442695
        %v780 = vpow.pop %v779
        %v781 = vmul.f32 %v720, 1.442695
        %v782 = vpow.pop %v781
        %v783 = vmul.f32 %v721, 1.442695
        %v784 = vpow.pop %v783
        %v785 = vmul.f32 %v722, 1.442695
        %v786 = vpow.pop %v785
        %v787 = vadd.f32 %v724, %v740
        %v788 = vadd.f32 %v787, %v756
        %v789 = vadd.f32 %v788, %v772
        %v790 = vrot.slane %v789, 4
        %v791 = vadd.f32 %v789, %v790
        %v792 = vrot.slane %v791, 2
        %v793 = vadd.f32 %v791, %v792
        %v794 = vrot.slane %v793, 1
        %v795 = vadd.f32 %v793, %v794
        %v796 = vadd.f32 %v726, %v742
        %v797 = vadd.f32 %v796, %v758
        %v798 = vadd.f32 %v797, %v774
        %v799 = vrot.slane %v798, 4
        %v800 = vadd.f32 %v798, %v799
        %v801 = vrot.slane %v800, 2
        %v802 = vadd.f32 %v800, %v801
        %v803 = vrot.slane %v802, 1
        %v804 = vadd.f32 %v802, %v803
        %v805 = vadd.f32 %v728, %v744
        %v806 = vadd.f32 %v805, %v760
        %v807 = vadd.f32 %v806, %v776
        %v808 = vrot.slane %v807, 4
        %v809 = vadd.f32 %v807, %v808
        %v810 = vrot.slane %v809, 2
        %v811 = vadd.f32 %v809, %v810
        %v812 = vrot.slane %v811, 1
        %v813 = vadd.f32 %v811, %v812
        %v814 = vadd.f32 %v730, %v746
        %v815 = vadd.f32 %v814, %v762
        %v816 = vadd.f32 %v815, %v778
        %v817 = vrot.slane %v816, 4
        %v818 = vadd.f32 %v816, %v817
        %v819 = vrot.slane %v818, 2
        %v820 = vadd.f32 %v818, %v819
        %v821 = vrot.slane %v820, 1
        %v822 = vadd.f32 %v820, %v821
        %v823 = vadd.f32 %v732, %v748
        %v824 = vadd.f32 %v823, %v764
        %v825 = vadd.f32 %v824, %v780
        %v826 = vrot.slane %v825, 4
        %v827 = vadd.f32 %v825, %v826
        %v828 = vrot.slane %v827, 2
        %v829 = vadd.f32 %v827, %v828
        %v830 = vrot.slane %v829, 1
        %v831 = vadd.f32 %v829, %v830
        %v832 = vadd.f32 %v734, %v750
        %v833 = vadd.f32 %v832, %v766
        %v834 = vadd.f32 %v833, %v782
        %v835 = vrot.slane %v834, 4
        %v836 = vadd.f32 %v834, %v835
        %v837 = vrot.slane %v836, 2
        %v838 = vadd.f32 %v836, %v837
        %v839 = vrot.slane %v838, 1
        %v840 = vadd.f32 %v838, %v839
        %v841 = vadd.f32 %v736, %v752
        %v842 = vadd.f32 %v841, %v768
        %v843 = vadd.f32 %v842, %v784
        %v844 = vrot.slane %v843, 4
        %v845 = vadd.f32 %v843, %v844
        %v846 = vrot.slane %v845, 2
        %v847 = vadd.f32 %v845, %v846
        %v848 = vrot.slane %v847, 1
        %v849 = vadd.f32 %v847, %v848
        %v850 = vadd.f32 %v738, %v754
        %v851 = vadd.f32 %v850, %v770
        %v852 = vadd.f32 %v851, %v786
        %v853 = vrot.slane %v852, 4
        %v854 = vadd.f32 %v852, %v853
        %v855 = vrot.slane %v854, 2
        %v856 = vadd.f32 %v854, %v855
        %v857 = vrot.slane %v856, 1
        %v858 = vadd.f32 %v856, %v857
        %v859 = vrcp.pop %v795
        %v860 = vrcp.pop %v804
        %v861 = vrcp.pop %v813
        %v862 = vrcp.pop %v822
        %v863 = vrcp.pop %v831
        %v864 = vrcp.pop %v840
        %v865 = vrcp.pop %v849
        %v866 = vrcp.pop %v858
        %v867 = vmul.f32 %v724, %v859
        %v868 = vmul.f32 %v726, %v860
        %v869 = vmul.f32 %v728, %v861
        %v870 = vmul.f32 %v730, %v862
        %v871 = vmul.f32 %v732, %v863
        %v872 = vmul.f32 %v734, %v864
        %v873 = vmul.f32 %v736, %v865
        %v874 = vmul.f32 %v738, %v866
        %v875 = vmul.f32 %v740, %v859
        %v876 = vmul.f32 %v742, %v860
        %v877 = vmul.f32 %v744, %v861
        %v878 = vmul.f32 %v746, %v862
        %v879 = vmul.f32 %v748, %v863
        %v880 = vmul.f32 %v750, %v864
        %v881 = vmul.f32 %v752, %v865
        %v882 = vmul.f32 %v754, %v866
        %v883 = vmul.f32 %v756, %v859
        %v884 = vmul.f32 %v758, %v860
        %v885 = vmul.f32 %v760, %v861
        %v886 = vmul.f32 %v762, %v862
        %v887 = vmul.f32 %v764, %v863
        %v888 = vmul.f32 %v766, %v864
        %v889 = vmul.f32 %v768, %v865
        %v890 = vmul.f32 %v770, %v866
        %v891 = vmul.f32 %v772, %v859
        %v892 = vmul.f32 %v774, %v860
        %v893 = vmul.f32 %v776, %v861
        %v894 = vmul.f32 %v778, %v862
        %v895 = vmul.f32 %v780, %v863
        %v896 = vmul.f32 %v782, %v864
        %v897 = vmul.f32 %v784, %v865
        %v898 = vmul.f32 %v786, %v866
        %v899 = vpack.c.bf16 %v875, %v867
        %v900 = vpack.c.bf16 %v876, %v868
        %v901 = vpack.c.bf16 %v877, %v869
        %v902 = vpack.c.bf16 %v878, %v870
        %v903 = vpack.c.bf16 %v879, %v871
        %v904 = vpack.c.bf16 %v880, %v872
        %v905 = vpack.c.bf16 %v881, %v873
        %v906 = vpack.c.bf16 %v882, %v874
        %v907 = vpack.c.bf16 %v891, %v883
        %v908 = vpack.c.bf16 %v892, %v884
        %v909 = vpack.c.bf16 %v893, %v885
        %v910 = vpack.c.bf16 %v894, %v886
        %v911 = vpack.c.bf16 %v895, %v887
        %v912 = vpack.c.bf16 %v896, %v888
        %v913 = vpack.c.bf16 %v897, %v889
        %v914 = vpack.c.bf16 %v898, %v890
        %v915 = vld [vmem:[#allocation2] sm:$0xff]
        %v916 = vld [vmem:[#allocation2 + $0x8] sm:$0xff]
        %v917 = vld [vmem:[#allocation2 + $0x10] sm:$0xff]
        %v918 = vld [vmem:[#allocation2 + $0x18] sm:$0xff]
        %919 = vmatprep.subr.bf16.mxu0 %v900
        %920 = vmatpush1.bf16.xpose.msra.mxu0 %v899
        %921 = vmatprep.subr.bf16.mxu0 %v908
        %922 = vmatpush1.bf16.xpose.msra.mxu0 %v907
        %923 = vmatprep.subr.bf16.mxu0 0
        %924 = vmatpush1.bf16.xpose.msra.mxu0 0
        %925 = vmatprep.subr.bf16.mxu0 0
        %926 = vmatpush1.bf16.xpose.msra.mxu0 0
        %927 = vmatprep.subr.bf16.mxu0 0
        %928 = vmatpush1.bf16.xpose.msra.mxu0 0
        %929 = vmatprep.subr.bf16.mxu0 0
        %930 = vmatpush1.bf16.xpose.msra.mxu0 0
        %931 = vmatprep.subr.bf16.mxu0 0
        %932 = vmatpush1.bf16.xpose.msra.mxu0 0
        %933 = vmatprep.subr.bf16.mxu0 0
        %934 = vmatpush1.bf16.xpose.msra.mxu0 0
        %935 = vmatprep.subr.bf16.mxu0 0
        %936 = vmatpush1.bf16.xpose.msra.mxu0 0
        %937 = vmatprep.subr.bf16.mxu0 0
        %938 = vmatpush1.bf16.xpose.msra.mxu0 0
        %939 = vmatprep.subr.bf16.mxu0 0
        %940 = vmatpush1.bf16.xpose.msra.mxu0 0
        %941 = vmatprep.subr.bf16.mxu0 0
        %942 = vmatpush1.bf16.xpose.msra.mxu0 0
        %943 = vmatprep.subr.bf16.mxu0 0
        %944 = vmatpush1.bf16.xpose.msra.mxu0 0
        %945 = vmatprep.subr.bf16.mxu0 0
        %946 = vmatpush1.bf16.xpose.msra.mxu0 0
        %947 = vmatprep.subr.bf16.mxu0 0
        %948 = vmatpush1.bf16.xpose.msra.mxu0 0
        %949 = vmatprep.subr.bf16.mxu0 0
        %950 = vmatpush1.bf16.xpose.msra.mxu0 0
        %951 = vmatprep.mubr.bf16.mxu0 %v566
        %952 = vmatmul.mubr.bf16.gmra.mrb[0].mxu0 %v565
        %v953 = vpop.f32.mrb[0].mxu0
        %v954 = vadd.f32 0.0, %v953
        %v955 = vpop.f32.mrb[0].mxu0
        %v956 = vpop.f32.mrb[0].mxu0
        %v957 = vadd.f32 0.0, %v956
        %v958 = vpop.f32.mrb[0].mxu0
        %959 = vmatprep.mubr.bf16.mxu0 %v574
        %960 = vmatmul.mubr.bf16.gmra.mrb[0].mxu0 %v573
        %v961 = vpop.f32.mrb[0].mxu0
        %v962 = vadd.f32 0.0, %v961
        %v963 = vpop.f32.mrb[0].mxu0
        %v964 = vpop.f32.mrb[0].mxu0
        %v965 = vadd.f32 0.0, %v964
        %v966 = vpop.f32.mrb[0].mxu0
        %967 = vdwg.mxu0
        %968 = vmatprep.subr.bf16.mxu0 %v902
        %969 = vmatpush1.bf16.xpose.msra.mxu0 %v901
        %970 = vmatprep.subr.bf16.mxu0 %v910
        %971 = vmatpush1.bf16.xpose.msra.mxu0 %v909
        %972 = vmatprep.subr.bf16.mxu0 0
        %973 = vmatpush1.bf16.xpose.msra.mxu0 0
        %974 = vmatprep.subr.bf16.mxu0 0
        %975 = vmatpush1.bf16.xpose.msra.mxu0 0
        %976 = vmatprep.subr.bf16.mxu0 0
        %977 = vmatpush1.bf16.xpose.msra.mxu0 0
        %978 = vmatprep.subr.bf16.mxu0 0
        %979 = vmatpush1.bf16.xpose.msra.mxu0 0
        %980 = vmatprep.subr.bf16.mxu0 0
        %981 = vmatpush1.bf16.xpose.msra.mxu0 0
        %982 = vmatprep.subr.bf16.mxu0 0
        %983 = vmatpush1.bf16.xpose.msra.mxu0 0
        %984 = vmatprep.subr.bf16.mxu0 0
        %985 = vmatpush1.bf16.xpose.msra.mxu0 0
        %986 = vmatprep.subr.bf16.mxu0 0
        %987 = vmatpush1.bf16.xpose.msra.mxu0 0
        %988 = vmatprep.subr.bf16.mxu0 0
        %989 = vmatpush1.bf16.xpose.msra.mxu0 0
        %990 = vmatprep.subr.bf16.mxu0 0
        %991 = vmatpush1.bf16.xpose.msra.mxu0 0
        %992 = vmatprep.subr.bf16.mxu0 0
        %993 = vmatpush1.bf16.xpose.msra.mxu0 0
        %994 = vmatprep.subr.bf16.mxu0 0
        %995 = vmatpush1.bf16.xpose.msra.mxu0 0
        %996 = vmatprep.subr.bf16.mxu0 0
        %997 = vmatpush1.bf16.xpose.msra.mxu0 0
        %998 = vmatprep.subr.bf16.mxu0 0
        %999 = vmatpush1.bf16.xpose.msra.mxu0 0
        %1000 = vmatprep.mubr.bf16.mxu0 %v568
        %1001 = vmatmul.mubr.bf16.gmra.mrb[0].mxu0 %v567
        %v1002 = vpop.f32.mrb[0].mxu0
        %v1003 = vadd.f32 %v954, %v1002
        %v1004 = vpop.f32.mrb[0].mxu0
        %v1005 = vpop.f32.mrb[0].mxu0
        %v1006 = vadd.f32 %v957, %v1005
        %v1007 = vpop.f32.mrb[0].mxu0
        %1008 = vmatprep.mubr.bf16.mxu0 %v576
        %1009 = vmatmul.mubr.bf16.gmra.mrb[0].mxu0 %v575
        %v1010 = vpop.f32.mrb[0].mxu0
        %v1011 = vadd.f32 %v962, %v1010
        %v1012 = vpop.f32.mrb[0].mxu0
        %v1013 = vpop.f32.mrb[0].mxu0
        %v1014 = vadd.f32 %v965, %v1013
        %v1015 = vpop.f32.mrb[0].mxu0
        %1016 = vdwg.mxu0
        %1017 = vmatprep.subr.bf16.mxu0 %v904
        %1018 = vmatpush1.bf16.xpose.msra.mxu0 %v903
        %1019 = vmatprep.subr.bf16.mxu0 %v912
        %1020 = vmatpush1.bf16.xpose.msra.mxu0 %v911
        %1021 = vmatprep.subr.bf16.mxu0 0
        %1022 = vmatpush1.bf16.xpose.msra.mxu0 0
        %1023 = vmatprep.subr.bf16.mxu0 0
        %1024 = vmatpush1.bf16.xpose.msra.mxu0 0
        %1025 = vmatprep.subr.bf16.mxu0 0
        %1026 = vmatpush1.bf16.xpose.msra.mxu0 0
        %1027 = vmatprep.subr.bf16.mxu0 0
        %1028 = vmatpush1.bf16.xpose.msra.mxu0 0
        %1029 = vmatprep.subr.bf16.mxu0 0
        %1030 = vmatpush1.bf16.xpose.msra.mxu0 0
        %1031 = vmatprep.subr.bf16.mxu0 0
        %1032 = vmatpush1.bf16.xpose.msra.mxu0 0
        %1033 = vmatprep.subr.bf16.mxu0 0
        %1034 = vmatpush1.bf16.xpose.msra.mxu0 0
        %1035 = vmatprep.subr.bf16.mxu0 0
        %1036 = vmatpush1.bf16.xpose.msra.mxu0 0
        %1037 = vmatprep.subr.bf16.mxu0 0
        %1038 = vmatpush1.bf16.xpose.msra.mxu0 0
        %1039 = vmatprep.subr.bf16.mxu0 0
        %1040 = vmatpush1.bf16.xpose.msra.mxu0 0
        %1041 = vmatprep.subr.bf16.mxu0 0
        %1042 = vmatpush1.bf16.xpose.msra.mxu0 0
        %1043 = vmatprep.subr.bf16.mxu0 0
        %1044 = vmatpush1.bf16.xpose.msra.mxu0 0
        %1045 = vmatprep.subr.bf16.mxu0 0
        %1046 = vmatpush1.bf16.xpose.msra.mxu0 0
        %1047 = vmatprep.subr.bf16.mxu0 0
        %1048 = vmatpush1.bf16.xpose.msra.mxu0 0
        %1049 = vmatprep.mubr.bf16.mxu0 %v570
        %1050 = vmatmul.mubr.bf16.gmra.mrb[0].mxu0 %v569
        %v1051 = vpop.f32.mrb[0].mxu0
        %v1052 = vadd.f32 %v1003, %v1051
        %v1053 = vpop.f32.mrb[0].mxu0
        %v1054 = vpop.f32.mrb[0].mxu0
        %v1055 = vadd.f32 %v1006, %v1054
        %v1056 = vpop.f32.mrb[0].mxu0
        %1057 = vmatprep.mubr.bf16.mxu0 %v578
        %1058 = vmatmul.mubr.bf16.gmra.mrb[0].mxu0 %v577
        %v1059 = vpop.f32.mrb[0].mxu0
        %v1060 = vadd.f32 %v1011, %v1059
        %v1061 = vpop.f32.mrb[0].mxu0
        %v1062 = vpop.f32.mrb[0].mxu0
        %v1063 = vadd.f32 %v1014, %v1062
        %v1064 = vpop.f32.mrb[0].mxu0
        %1065 = vdwg.mxu0
        %1066 = vmatprep.subr.bf16.mxu0 %v906
        %1067 = vmatpush1.bf16.xpose.msra.mxu0 %v905
        %1068 = vmatprep.subr.bf16.mxu0 %v914
        %1069 = vmatpush1.bf16.xpose.msra.mxu0 %v913
        %1070 = vmatprep.subr.bf16.mxu0 0
        %1071 = vmatpush1.bf16.xpose.msra.mxu0 0
        %1072 = vmatprep.subr.bf16.mxu0 0
        %1073 = vmatpush1.bf16.xpose.msra.mxu0 0
        %1074 = vmatprep.subr.bf16.mxu0 0
        %1075 = vmatpush1.bf16.xpose.msra.mxu0 0
        %1076 = vmatprep.subr.bf16.mxu0 0
        %1077 = vmatpush1.bf16.xpose.msra.mxu0 0
        %1078 = vmatprep.subr.bf16.mxu0 0
        %1079 = vmatpush1.bf16.xpose.msra.mxu0 0
        %1080 = vmatprep.subr.bf16.mxu0 0
        %1081 = vmatpush1.bf16.xpose.msra.mxu0 0
        %1082 = vmatprep.subr.bf16.mxu0 0
        %1083 = vmatpush1.bf16.xpose.msra.mxu0 0
        %1084 = vmatprep.subr.bf16.mxu0 0
        %1085 = vmatpush1.bf16.xpose.msra.mxu0 0
        %1086 = vmatprep.subr.bf16.mxu0 0
        %1087 = vmatpush1.bf16.xpose.msra.mxu0 0
        %1088 = vmatprep.subr.bf16.mxu0 0
        %1089 = vmatpush1.bf16.xpose.msra.mxu0 0
        %1090 = vmatprep.subr.bf16.mxu0 0
        %1091 = vmatpush1.bf16.xpose.msra.mxu0 0
        %1092 = vmatprep.subr.bf16.mxu0 0
        %1093 = vmatpush1.bf16.xpose.msra.mxu0 0
        %1094 = vmatprep.subr.bf16.mxu0 0
        %1095 = vmatpush1.bf16.xpose.msra.mxu0 0
        %1096 = vmatprep.subr.bf16.mxu0 0
        %1097 = vmatpush1.bf16.xpose.msra.mxu0 0
        %1098 = vmatprep.mubr.bf16.mxu0 %v572
        %1099 = vmatmul.mubr.bf16.gmra.mrb[0].mxu0 %v571
        %v1100 = vpop.f32.mrb[0].mxu0
        %v1101 = vadd.f32 %v1052, %v1100
        %v1102 = vpop.f32.mrb[0].mxu0
        %v1103 = vpop.f32.mrb[0].mxu0
        %v1104 = vadd.f32 %v1055, %v1103
        %v1105 = vpop.f32.mrb[0].mxu0
        %1106 = vmatprep.mubr.bf16.mxu0 %v580
        %1107 = vmatmul.mubr.bf16.gmra.mrb[0].mxu0 %v579
        %v1108 = vpop.f32.mrb[0].mxu0
        %v1109 = vadd.f32 %v1060, %v1108
        %v1110 = vpop.f32.mrb[0].mxu0
        %v1111 = vpop.f32.mrb[0].mxu0
        %v1112 = vadd.f32 %v1063, %v1111
        %v1113 = vpop.f32.mrb[0].mxu0
        %1114 = vdwg.mxu0
        %v1115 = vadd.f32 %v915, %v1101
        %v1116 = vadd.f32 %v916, %v1104
        %v1117 = vadd.f32 %v917, %v1109
        %v1118 = vadd.f32 %v918, %v1112
        %vm1119 = vcmask 261120
        %1120 = vst.msk [vmem:[#allocation2] sm:$0xff] %vm1119, %v1115
        %1121 = vst.msk [vmem:[#allocation2 + $0x8] sm:$0xff] %vm1119, %v1116
        %1122 = vst.msk [vmem:[#allocation2 + $0x10] sm:$0xff] %vm1119, %v1117
        %1123 = vst.msk [vmem:[#allocation2 + $0x18] sm:$0xff] %vm1119, %v1118
        // Predicated region
        $region41: #{tpu_custom_call.1} parent=27 // pred_check
          %p1124 = pneg %p221
        $region42: #{tpu_custom_call.1} parent=27 // pred_check_branch
          %1126 = sbr.rel (%p1124) target = $region44
        $region43: #{tpu_custom_call.1} parent=27 // pred_region
          %v1127 = vld [vmem:[#allocation2] sm:$0xff]
          %v1128 = vld [vmem:[#allocation2 + $0x8] sm:$0xff]
          %v1129 = vld [vmem:[#allocation2 + $0x10] sm:$0xff]
          %v1130 = vld [vmem:[#allocation2 + $0x18] sm:$0xff]
          %v1131 = vrcp.pop 4.0
          %v1132 = vmul.f32 %v1127, %v1131
          %v1133 = vmul.f32 %v1128, %v1131
          %v1134 = vmul.f32 %v1129, %v1131
          %v1135 = vmul.f32 %v1130, %v1131
          %v1136 = vsel %vm1119, %v1127, 0.0
          %1137 = vadd.xlane.f32.xlu0 %v1136
          %v1138 = vpop.xlane.xlu0 %1137
          %v1139 = vsel %vm1119, %v1128, 0.0
          %1140 = vadd.xlane.f32.xlu0 %v1139
          %v1141 = vpop.xlane.xlu0 %1140
          %v1142 = vsel %vm1119, %v1129, 0.0
          %1143 = vadd.xlane.f32.xlu0 %v1142
          %v1144 = vpop.xlane.xlu0 %1143
          %v1145 = vsel %vm1119, %v1130, 0.0
          %1146 = vadd.xlane.f32.xlu0 %v1145
          %v1147 = vpop.xlane.xlu0 %1146
          %v1148 = vmul.f32 %v1138, 0.0009765625
          %v1149 = vmul.f32 %v1141, 0.0009765625
          %v1150 = vmul.f32 %v1144, 0.0009765625
          %v1151 = vmul.f32 %v1147, 0.0009765625
          %v1152 = vadd.f32 %v1136, %v1139
          %v1153 = vadd.f32 %v1152, %v1142
          %v1154 = vadd.f32 %v1153, %v1145
          %v1155 = vrot.slane %v1154, 4
          %v1156 = vadd.f32 %v1154, %v1155
          %v1157 = vrot.slane %v1156, 2
          %v1158 = vadd.f32 %v1156, %v1157
          %v1159 = vrot.slane %v1158, 1
          %v1160 = vadd.f32 %v1158, %v1159
          %v1161 = vmul.f32 %v1160, 0.0009765625
          %v1162 = vmul.f32 %v1148, %v1161
          %v1163 = vmul.f32 %v1149, %v1161
          %v1164 = vmul.f32 %v1150, %v1161
          %v1165 = vmul.f32 %v1151, %v1161
          %v1166 = vadd.f32 %v1162, 1e-06
          %v1167 = vadd.f32 %v1163, 1e-06
          %v1168 = vadd.f32 %v1164, 1e-06
          %v1169 = vadd.f32 %v1165, 1e-06
          %v1170 = vrcp.pop %v1166
          %v1171 = vmul.f32 %v1132, %v1170
          %v1172 = vrcp.pop %v1167
          %v1173 = vmul.f32 %v1133, %v1172
          %v1174 = vrcp.pop %v1168
          %v1175 = vmul.f32 %v1134, %v1174
          %v1176 = vrcp.pop %v1169
          %v1177 = vmul.f32 %v1135, %v1176
          %v1178 = vadd.f32 %v1171, 1e-06
          %v1179 = vadd.f32 %v1173, 1e-06
          %v1180 = vadd.f32 %v1175, 1e-06
          %v1181 = vadd.f32 %v1177, 1e-06
          %v1182 = vlog2.pop %v1178
          %v1183 = vmul.f32 %v1182, 0.6931472
          %v1184 = vlog2.pop %v1179
          %v1185 = vmul.f32 %v1184, 0.6931472
          %v1186 = vlog2.pop %v1180
          %v1187 = vmul.f32 %v1186, 0.6931472
          %v1188 = vlog2.pop %v1181
          %v1189 = vmul.f32 %v1188, 0.6931472
          %v1190 = vmul.f32 %v1132, %v1183
          %v1191 = vmul.f32 %v1133, %v1185
          %v1192 = vmul.f32 %v1134, %v1187
          %v1193 = vmul.f32 %v1135, %v1189
          %v1194 = vsel %vm1119, %v1190, 0.0
          %v1195 = vsel %vm1119, %v1191, 0.0
          %v1196 = vadd.f32 %v1194, %v1195
          %v1197 = vsel %vm1119, %v1192, 0.0
          %v1198 = vadd.f32 %v1196, %v1197
          %v1199 = vsel %vm1119, %v1193, 0.0
          %v1200 = vadd.f32 %v1198, %v1199
          %1201 = vadd.xlane.f32.xlu0 %v1200
          %v1202 = vpop.xlane.xlu0 %1201
          %v1203 = vrot.slane %v1202, 4
          %v1204 = vadd.f32 %v1202, %v1203
          %v1205 = vrot.slane %v1204, 2
          %v1206 = vadd.f32 %v1204, %v1205
          %v1207 = vrot.slane %v1206, 1
          %v1208 = vadd.f32 %v1206, %v1207
          %s1209 = vtos %v1208
          %v1210 = vstv %s1209
          %1211 = vst [vmem:[%s217] sm:$0xff] %v1210
        $region44: #{tpu_custom_call.1} parent=27 // pred_fallthru
          _
        %s1212 = sand.u32 %s98, 1
        %s1213 = scalar_lea.sflag [#allocation5], %s1212
        %s1214 = sand.u32 %s98, 1
        %s1215 = smul.addr %s1214, 8
        %s1216 = scalar_lea.vmem [#allocation8], %s1215
        // Predicated region
        $region45: #{tpu_custom_call.1} parent=27 // pred_check
          %p1217 = pneg %p108
        $region46: #{tpu_custom_call.1} parent=27 // pred_check_branch
          %1219 = sbr.rel (%p1217) target = $region48
        $region47: #{tpu_custom_call.1} parent=27 // pred_region
          %s1221 = ssub.s32 128, 128
          %1222 = vsyncadd %s1213, %s1221
          %s1223 = smul.addr %s26, 128
          %s1224 = scalar_lea.hbm %s2, %s1223
          %s1226 = sshll.u32 %s1216, 4
          %s1227 = int_to_ptr.vmem [resolvable:$true] %s1226
          %1229 = dma.vmem_to_hbm [thread:$0]  %s1227, 128, %s1224, %s1213
        $region48: #{tpu_custom_call.1} parent=27 // pred_fallthru
          _
      $region28: #{tpu_custom_call.1} parent=5 // pred_fallthru
        _
      %p1230 = scmp.le.s32.totalorder 2, %s17
      // Predicated region
      $region49: #{tpu_custom_call.1} parent=5 // pred_check
        %p1231 = pneg %p1230
      $region50: #{tpu_custom_call.1} parent=5 // pred_check_branch
        %1233 = sbr.rel (%p1231) target = $region52
      $region51: #{tpu_custom_call.1} parent=5 // pred_region
        %s1234 = ssub.s32 %s17, 2
        // Predicated region
        $region53: #{tpu_custom_call.1} parent=51 // pred_check
          %p1235 = pneg %p114
        $region54: #{tpu_custom_call.1} parent=51 // pred_check_branch
          %1237 = sbr.rel (%p1235) target = $region56
        $region55: #{tpu_custom_call.1} parent=51 // pred_region
          %s1238 = sand.u32 %s99, 1
          %s1239 = scalar_lea.sflag [#allocation5], %s1238
          %s1240 = sand.u32 %s99, 1
          %s1241 = smul.addr %s1240, 8
          %s1242 = scalar_lea.vmem [#allocation8], %s1241
          %1243 = dma.done %s1239, 128
        $region56: #{tpu_custom_call.1} parent=51 // pred_fallthru
          _
      $region52: #{tpu_custom_call.1} parent=5 // pred_fallthru
        _
    $region6: #{tpu_custom_call.1} parent=1 // loop_footer
      %s21 = sadd.s32 1, %s17
    $region7: #{tpu_custom_call.1} parent=1 // loop_footer_branch
      %16 = sbr.rel target = $region3
    $region8: #{tpu_custom_call.1} parent=1 // loop_exit
      _
    %1244 = vsyncpa [#allocation4], 1
    %s1245 = scalar_lea.sflag [#allocation4], 1
    %1246 = vsyncpa %s1245, 1
    %1247 = vsyncpa [#allocation7], 1
    %s1248 = scalar_lea.sflag [#allocation7], 1
    %1249 = vsyncpa %s1248, 1
    %1250 = vsyncpa [#allocation5], 1
    %s1251 = scalar_lea.sflag [#allocation5], 1
    %1252 = vsyncpa %s1251, 1

</llo_original>
